<compile_context>
chip_gen: v7x
topology: tpu7x:2x2x1
jax: 0.10.0
libtpu: 0.0.40
codegen_flags: <defaults>
</compile_context>

<pallas_src>
import functools

import jax
import jax.numpy as jnp
from jax.experimental import pallas as pl
from jax.experimental.pallas import tpu as pltpu

_LANE = 128


def _round_up(n, m):
    return ((n + m - 1) // m) * m


def _mlp_kernel(x_ref, w1_ref, b1_ref, w2_ref, b2_ref, o_ref):
    # x: (TB, In) bf16; w1: (In, Hp) bf16; b1: (1, Hp) f32
    # w2: (Hp, Outp) bf16; b2: (1, Outp) f32; o: (TB, Outp) f32
    h = jnp.dot(x_ref[...], w1_ref[...],
                preferred_element_type=jnp.float32)        # (TB, Hp) f32
    h = jnp.tanh(h + b1_ref[...])                          # bias + tanh in f32
    y = jnp.dot(h.astype(w2_ref.dtype), w2_ref[...],
                preferred_element_type=jnp.float32)        # (TB, Outp) f32
    o_ref[...] = (y + b2_ref[...]).astype(o_ref.dtype)


@functools.partial(jax.jit, static_argnames=("block_b",))
def simple_classifier_forward(x, w1, b1, w2, b2, *, block_b=256):
    """x: (B, num_inputs); w1: (num_inputs, num_hidden); b1: (1, num_hidden);
    w2: (num_hidden, num_outputs); b2: (1, num_outputs). Returns f32 (B, num_outputs)."""
    B, num_in = x.shape
    num_hidden = w1.shape[1]
    num_out = w2.shape[1]

    # Lane-dense padding of the feature dims (zero-padded columns/rows are
    # exactly neutral: tanh(0+0)=0 hidden units hit all-zero w2 rows, and the
    # padded output columns are sliced off below).
    hp = _round_up(num_hidden, _LANE)
    outp = _round_up(num_out, _LANE)

    # Batch tile: multiple of 8 sublanes, capped at block_b.
    tb = min(block_b, _round_up(B, 8))
    bp = _round_up(B, tb)

    # bf16 MXU operands; biases stay f32 (bias-add/tanh done in f32 in-kernel).
    xp = jnp.zeros((bp, num_in), jnp.bfloat16).at[:B].set(x.astype(jnp.bfloat16))
    w1p = jnp.zeros((num_in, hp), jnp.bfloat16).at[:, :num_hidden].set(
        w1.astype(jnp.bfloat16))
    b1p = jnp.zeros((1, hp), jnp.float32).at[:, :num_hidden].set(
        b1.astype(jnp.float32))
    w2p = jnp.zeros((hp, outp), jnp.bfloat16).at[:num_hidden, :num_out].set(
        w2.astype(jnp.bfloat16))
    b2p = jnp.zeros((1, outp), jnp.float32).at[:, :num_out].set(
        b2.astype(jnp.float32))

    grid = (bp // tb,)
    resident = lambda shape: pl.BlockSpec(shape, lambda i: (0, 0))  # stays in VMEM

    out_padded = pl.pallas_call(
        _mlp_kernel,
        out_shape=jax.ShapeDtypeStruct((bp, outp), jnp.float32),
        grid=grid,
        in_specs=[
            pl.BlockSpec((tb, num_in), lambda i: (i, 0)),   # batch-tiled input
            resident((num_in, hp)),                         # w1
            resident((1, hp)),                              # b1
            resident((hp, outp)),                           # w2
            resident((1, outp)),                            # b2
        ],
        out_specs=pl.BlockSpec((tb, outp), lambda i: (i, 0)),
        compiler_params=pltpu.CompilerParams(
            dimension_semantics=("parallel",)),             # 2x on v7x dual-TC
    )(xp, w1p, b1p, w2p, b2p)

    return out_padded[:B, :num_out]


def init_params(key, num_inputs, num_hidden, num_outputs):
    """Deterministic init mirroring nn.Linear's U(-1/sqrt(fan_in), 1/sqrt(fan_in))."""
    k1, k2, k3, k4 = jax.random.split(key, 4)
    lim1 = 1.0 / jnp.sqrt(num_inputs)
    lim2 = 1.0 / jnp.sqrt(num_hidden)
    # Stored as (in, out) == transpose of torch's (out, in) weight.
    w1 = jax.random.uniform(k1, (num_inputs, num_hidden), jnp.float32, -lim1, lim1)
    b1 = jax.random.uniform(k2, (1, num_hidden), jnp.float32, -lim1, lim1)
    w2 = jax.random.uniform(k3, (num_hidden, num_outputs), jnp.float32, -lim2, lim2)
    b2 = jax.random.uniform(k4, (1, num_outputs), jnp.float32, -lim2, lim2)
    return w1, b1, w2, b2


if __name__ == "__main__":
    num_inputs, num_hidden, num_outputs = 4, 32, 2
    batch = 1000  # non-multiple of the batch tile: exercises padding + slicing

    key = jax.random.PRNGKey(0)
    kx, kp = jax.random.split(key)
    x = jax.random.normal(kx, (batch, num_inputs), dtype=jnp.float32)
    w1, b1, w2, b2 = init_params(kp, num_inputs, num_hidden, num_outputs)

    out = simple_classifier_forward(x, w1, b1, w2, b2)
    out = jax.block_until_ready(out)
    assert out.shape == (batch, num_outputs)
    assert out.dtype == jnp.float32

    # Reference 1: same bf16-operand / f32-accumulate math path -> tight check.
    xb, w1b, w2b = (a.astype(jnp.bfloat16) for a in (x, w1, w2))
    h_ref = jnp.tanh(jnp.dot(xb, w1b, preferred_element_type=jnp.float32) + b1)
    ref_bf16 = jnp.dot(h_ref.astype(jnp.bfloat16), w2b,
                       preferred_element_type=jnp.float32) + b2
    assert jnp.allclose(out, ref_bf16, atol=1e-4, rtol=1e-4)

    # Reference 2: full-f32 torch-equivalent forward -> loose check (bf16 operands).
    ref_f32 = jnp.tanh(x @ w1 + b1) @ w2 + b2
    assert jnp.allclose(out, ref_f32, atol=3e-2, rtol=3e-2)

    print("KERNEL_OK")
</pallas_src>

<mosaic_0001>
module attributes {stable_mosaic.version = 11 : i64} {
  func.func @_mlp_kernel(%arg0: i32, %arg1: memref<256x4xbf16, #tpu.memory_space<vmem>>, %arg2: memref<4x128xbf16, #tpu.memory_space<vmem>>, %arg3: memref<1x128xf32, #tpu.memory_space<vmem>>, %arg4: memref<128x128xbf16, #tpu.memory_space<vmem>>, %arg5: memref<1x128xf32, #tpu.memory_space<vmem>>, %arg6: memref<256x128xf32, #tpu.memory_space<vmem>>) attributes {dimension_semantics = [#tpu.dimension_semantics<parallel>], iteration_bounds = array<i64: 4>, scalar_prefetch = 0 : i64, scratch_operands = 0 : i64, tpu.core_type = #tpu.core_type<tc>, window_params = [{transform_indices = @transform_0, window_bounds = array<i64: 256, 4>}, {pipeline_mode = #tpu.pipeline_mode<synchronous>, transform_indices = @transform_1, window_bounds = array<i64: 4, 128>}, {pipeline_mode = #tpu.pipeline_mode<synchronous>, transform_indices = @transform_2, window_bounds = array<i64: 1, 128>}, {pipeline_mode = #tpu.pipeline_mode<synchronous>, transform_indices = @transform_3, window_bounds = array<i64: 128, 128>}, {pipeline_mode = #tpu.pipeline_mode<synchronous>, transform_indices = @transform_4, window_bounds = array<i64: 1, 128>}, {transform_indices = @transform_5, window_bounds = array<i64: 256, 128>}]} {
    %c0 = arith.constant 0 : index
    %c0_0 = arith.constant 0 : index
    %0 = vector.load %arg1[%c0, %c0_0] : memref<256x4xbf16, #tpu.memory_space<vmem>>, vector<256x4xbf16>
    %c0_1 = arith.constant 0 : index
    %c0_2 = arith.constant 0 : index
    %1 = vector.load %arg2[%c0_1, %c0_2] : memref<4x128xbf16, #tpu.memory_space<vmem>>, vector<4x128xbf16>
    %cst = arith.constant dense<0.000000e+00> : vector<256x128xf32>
    %2 = tpu.matmul %0, %1, %cst {dimension_numbers = #tpu.dot_dimension_numbers<[1], [0], [0], [1], [0, 0, 1, 1], [], []>} : vector<256x4xbf16>, vector<4x128xbf16>, vector<256x128xf32> -> vector<256x128xf32>
    %c0_3 = arith.constant 0 : index
    %c0_4 = arith.constant 0 : index
    %3 = vector.load %arg3[%c0_3, %c0_4] : memref<1x128xf32, #tpu.memory_space<vmem>>, vector<1x128xf32>
    %4 = vector.broadcast %3 : vector<1x128xf32> to vector<256x128xf32>
    %5 = arith.addf %2, %4 : vector<256x128xf32>
    %6 = math.tanh %5 : vector<256x128xf32>
    %7 = arith.truncf %6 : vector<256x128xf32> to vector<256x128xbf16>
    %c0_5 = arith.constant 0 : index
    %c0_6 = arith.constant 0 : index
    %8 = vector.load %arg4[%c0_5, %c0_6] : memref<128x128xbf16, #tpu.memory_space<vmem>>, vector<128x128xbf16>
    %cst_7 = arith.constant dense<0.000000e+00> : vector<256x128xf32>
    %9 = tpu.matmul %7, %8, %cst_7 {dimension_numbers = #tpu.dot_dimension_numbers<[1], [0], [0], [1], [0, 0, 1, 1], [], []>} : vector<256x128xbf16>, vector<128x128xbf16>, vector<256x128xf32> -> vector<256x128xf32>
    %c0_8 = arith.constant 0 : index
    %c0_9 = arith.constant 0 : index
    %10 = vector.load %arg5[%c0_8, %c0_9] : memref<1x128xf32, #tpu.memory_space<vmem>>, vector<1x128xf32>
    %11 = vector.broadcast %10 : vector<1x128xf32> to vector<256x128xf32>
    %12 = arith.addf %9, %11 : vector<256x128xf32>
    %c0_10 = arith.constant 0 : index
    %c0_11 = arith.constant 0 : index
    %13 = vector.load %arg6[%c0_10, %c0_11] : memref<256x128xf32, #tpu.memory_space<vmem>>, vector<256x128xf32>
    tpu.vector_store %arg6[%c0_10, %c0_11], %12 {strides = array<i32>} : memref<256x128xf32, #tpu.memory_space<vmem>>, vector<256x128xf32>,
    return
  }
  func.func @transform_0(%arg0: i32) -> (i32, i32) {
    %c0_i32 = arith.constant 0 : i32
    %c0_i32_0 = arith.constant 0 : i32
    return %arg0, %c0_i32 : i32, i32
  }
  func.func @transform_1(%arg0: i32) -> (i32, i32) {
    %c0_i32 = arith.constant 0 : i32
    %c0_i32_0 = arith.constant 0 : i32
    %c0_i32_1 = arith.constant 0 : i32
    return %c0_i32, %c0_i32_0 : i32, i32
  }
  func.func @transform_2(%arg0: i32) -> (i32, i32) {
    %c0_i32 = arith.constant 0 : i32
    %c0_i32_0 = arith.constant 0 : i32
    %c0_i32_1 = arith.constant 0 : i32
    return %c0_i32, %c0_i32_0 : i32, i32
  }
  func.func @transform_3(%arg0: i32) -> (i32, i32) {
    %c0_i32 = arith.constant 0 : i32
    %c0_i32_0 = arith.constant 0 : i32
    %c0_i32_1 = arith.constant 0 : i32
    return %c0_i32, %c0_i32_0 : i32, i32
  }
  func.func @transform_4(%arg0: i32) -> (i32, i32) {
    %c0_i32 = arith.constant 0 : i32
    %c0_i32_0 = arith.constant 0 : i32
    %c0_i32_1 = arith.constant 0 : i32
    return %c0_i32, %c0_i32_0 : i32, i32
  }
  func.func @transform_5(%arg0: i32) -> (i32, i32) {
    %c0_i32 = arith.constant 0 : i32
    %c0_i32_0 = arith.constant 0 : i32
    return %arg0, %c0_i32 : i32, i32
  }
}

</mosaic_0001>

<llo_original>
// kernel: simple_classifier_forward.1
$region0: #{simple_classifier_forward.1}
  #allocation0 [shape = 'u32[]', space=smem, size = 0x4, offset = 0x4, fixed_abs, tag = 'smem constant byte address 0x4 - core index']
  #allocation1 [shape = 'u32[144,128]{1,0:T(1,128)}', space=vmem, size = 0x12000, scoped, tag = 'internal scratch']
  %s0 = inlined_call_operand.vmem [shape: bf16[1024,4], index: 0, kind: input, shape index: {}]
  %s1 = inlined_call_operand.vmem [shape: bf16[4,128], index: 1, kind: input, shape index: {}]
  %s2 = inlined_call_operand.vmem [shape: f32[1,128], index: 2, kind: input, shape index: {}]
  %s3 = inlined_call_operand.vmem [shape: bf16[128,128], index: 3, kind: input, shape index: {}]
  %s4 = inlined_call_operand.vmem [shape: f32[1,128], index: 4, kind: input, shape index: {}]
  %s5 = inlined_call_operand.vmem [shape: f32[1024,128], index: 5, kind: output, shape index: {}]
  %s6 = sld [smem:[#allocation0]]
  $region53: #{simple_classifier_forward.1} parent=0
    _
  %s8 = ssub.s32 1, %s6
  %s9 = scalar_select 0, %s8, %s6
  loop: start=0, step=1, limit=6
  $region2: #{simple_classifier_forward.1} parent=0 // loop_pre_header
    _
  $region3: #{simple_classifier_forward.1} parent=0 // loop_header
    %s11 = sphi 0, %s15
    %p12 = scmp.ge.s32.totalorder %s11, 6
    %s21 = sphi 0, %s23
    %s24 = sphi 0, %s21
    %s25 = sphi 0, %s24
    %s41 = sphi 0, %s25
    %s45 = sphi 0, %s45
    %s47 = sphi 0, %s45
    %s48 = sphi 0, %s47
    %s62 = sphi 0, %s48
    %s66 = sphi 0, %s66
    %s68 = sphi 0, %s66
    %s69 = sphi 0, %s68
    %s83 = sphi 0, %s69
    %s87 = sphi 0, %s87
    %s89 = sphi 0, %s87
    %s90 = sphi 0, %s89
    %s104 = sphi 0, %s90
    %s108 = sphi 0, %s108
    %s110 = sphi 0, %s108
    %s111 = sphi 0, %s110
    %s125 = sphi 0, %s111
    %s131 = sphi 0, %s133
    %s134 = sphi 0, %s131
    %s135 = sphi 0, %s134
    %s151 = sphi 0, %s135
  $region4: #{simple_classifier_forward.1} parent=0 // loop_header_branch
    %14 = sbr.rel (%p12) target = $region8
  $region5: #{simple_classifier_forward.1} parent=0 // loop_body
    %s16 = ssub.s32 %s11, 1
    %s17 = ssub.s32 %s11, 2
    %s18 = sadd.s32 %s11, 1
    %s19 = ssub.s32 %s11, %s18
    %p20 = scmp.eq.s32.totalorder %s19, 0
    %s22 = sadd.s32 %s21, 1
    %s23 = scalar_select %p20, %s21, %s22
    %p26 = pneg %p20
    %p27 = scmp.eq.s32.totalorder %s11, 3
    %p28 = por %p26, %p27
    %p29 = scmp.ne.s32.totalorder %s21, %s24
    %p30 = scmp.eq.s32.totalorder %s11, 0
    %p31 = por %p29, %p30
    %p32 = scmp.ne.s32.totalorder %s21, %s24
    %p33 = scmp.eq.s32.totalorder %s16, 3
    %p34 = por %p32, %p33
    %p35 = scmp.ne.s32.totalorder %s24, %s25
    %p36 = scmp.eq.s32.totalorder %s16, 0
    %p37 = por %p35, %p36
    %p38 = scmp.ne.s32.totalorder %s24, %s25
    %p39 = scmp.eq.s32.totalorder %s17, 3
    %p40 = por %p38, %p39
    %p42 = scmp.ne.s32.totalorder %s25, %s41
    %p43 = scmp.eq.s32.totalorder %s17, 0
    %p44 = por %p42, %p43
    %s46 = sadd.s32 %s45, 1
    %p49 = scmp.eq.s32.totalorder %s11, 3
    %p50 = scmp.ne.s32.totalorder %s45, %s47
    %p51 = scmp.eq.s32.totalorder %s11, 0
    %p52 = por %p50, %p51
    %p53 = scmp.ne.s32.totalorder %s45, %s47
    %p54 = scmp.eq.s32.totalorder %s16, 3
    %p55 = por %p53, %p54
    %p56 = scmp.ne.s32.totalorder %s47, %s48
    %p57 = scmp.eq.s32.totalorder %s16, 0
    %p58 = por %p56, %p57
    %p59 = scmp.ne.s32.totalorder %s47, %s48
    %p60 = scmp.eq.s32.totalorder %s17, 3
    %p61 = por %p59, %p60
    %p63 = scmp.ne.s32.totalorder %s48, %s62
    %p64 = scmp.eq.s32.totalorder %s17, 0
    %p65 = por %p63, %p64
    %s67 = sadd.s32 %s66, 1
    %p70 = scmp.eq.s32.totalorder %s11, 3
    %p71 = scmp.ne.s32.totalorder %s66, %s68
    %p72 = scmp.eq.s32.totalorder %s11, 0
    %p73 = por %p71, %p72
    %p74 = scmp.ne.s32.totalorder %s66, %s68
    %p75 = scmp.eq.s32.totalorder %s16, 3
    %p76 = por %p74, %p75
    %p77 = scmp.ne.s32.totalorder %s68, %s69
    %p78 = scmp.eq.s32.totalorder %s16, 0
    %p79 = por %p77, %p78
    %p80 = scmp.ne.s32.totalorder %s68, %s69
    %p81 = scmp.eq.s32.totalorder %s17, 3
    %p82 = por %p80, %p81
    %p84 = scmp.ne.s32.totalorder %s69, %s83
    %p85 = scmp.eq.s32.totalorder %s17, 0
    %p86 = por %p84, %p85
    %s88 = sadd.s32 %s87, 1
    %p91 = scmp.eq.s32.totalorder %s11, 3
    %p92 = scmp.ne.s32.totalorder %s87, %s89
    %p93 = scmp.eq.s32.totalorder %s11, 0
    %p94 = por %p92, %p93
    %p95 = scmp.ne.s32.totalorder %s87, %s89
    %p96 = scmp.eq.s32.totalorder %s16, 3
    %p97 = por %p95, %p96
    %p98 = scmp.ne.s32.totalorder %s89, %s90
    %p99 = scmp.eq.s32.totalorder %s16, 0
    %p100 = por %p98, %p99
    %p101 = scmp.ne.s32.totalorder %s89, %s90
    %p102 = scmp.eq.s32.totalorder %s17, 3
    %p103 = por %p101, %p102
    %p105 = scmp.ne.s32.totalorder %s90, %s104
    %p106 = scmp.eq.s32.totalorder %s17, 0
    %p107 = por %p105, %p106
    %s109 = sadd.s32 %s108, 1
    %p112 = scmp.eq.s32.totalorder %s11, 3
    %p113 = scmp.ne.s32.totalorder %s108, %s110
    %p114 = scmp.eq.s32.totalorder %s11, 0
    %p115 = por %p113, %p114
    %p116 = scmp.ne.s32.totalorder %s108, %s110
    %p117 = scmp.eq.s32.totalorder %s16, 3
    %p118 = por %p116, %p117
    %p119 = scmp.ne.s32.totalorder %s110, %s111
    %p120 = scmp.eq.s32.totalorder %s16, 0
    %p121 = por %p119, %p120
    %p122 = scmp.ne.s32.totalorder %s110, %s111
    %p123 = scmp.eq.s32.totalorder %s17, 3
    %p124 = por %p122, %p123
    %p126 = scmp.ne.s32.totalorder %s111, %s125
    %p127 = scmp.eq.s32.totalorder %s17, 0
    %p128 = por %p126, %p127
    %s129 = ssub.s32 %s11, %s18
    %p130 = scmp.eq.s32.totalorder %s129, 0
    %s132 = sadd.s32 %s131, 1
    %s133 = scalar_select %p130, %s131, %s132
    %p136 = pneg %p130
    %p137 = scmp.eq.s32.totalorder %s11, 3
    %p138 = por %p136, %p137
    %p139 = scmp.ne.s32.totalorder %s131, %s134
    %p140 = scmp.eq.s32.totalorder %s11, 0
    %p141 = por %p139, %p140
    %p142 = scmp.ne.s32.totalorder %s131, %s134
    %p143 = scmp.eq.s32.totalorder %s16, 3
    %p144 = por %p142, %p143
    %p145 = scmp.ne.s32.totalorder %s134, %s135
    %p146 = scmp.eq.s32.totalorder %s16, 0
    %p147 = por %p145, %p146
    %p148 = scmp.ne.s32.totalorder %s134, %s135
    %p149 = scmp.eq.s32.totalorder %s17, 3
    %p150 = por %p148, %p149
    %p152 = scmp.ne.s32.totalorder %s135, %s151
    %p153 = scmp.eq.s32.totalorder %s17, 0
    %p154 = por %p152, %p153
    %p155 = scmp.le.s32.totalorder 1, %s11
    %p156 = scmp.lt.s32.totalorder %s11, 5
    %p157 = pnand %p155, %p156
    %p158 = pneg %p157
    // Predicated region
    $region9: #{simple_classifier_forward.1} parent=5 // pred_check
      _
    $region10: #{simple_classifier_forward.1} parent=5 // pred_check_branch
      %160 = sbr.rel (%p157) target = $region12
    $region11: #{simple_classifier_forward.1} parent=5 // pred_region
      %s161 = ssub.s32 %s11, 1
      // Predicated region
      $region13: #{simple_classifier_forward.1} parent=11 // pred_check
        %p162 = pneg %p58
      $region14: #{simple_classifier_forward.1} parent=11 // pred_check_branch
        %164 = sbr.rel (%p162) target = $region16
      $region15: #{simple_classifier_forward.1} parent=11 // pred_region
        _
      $region16: #{simple_classifier_forward.1} parent=11 // pred_fallthru
        _
      // Predicated region
      $region17: #{simple_classifier_forward.1} parent=11 // pred_check
        %p165 = pneg %p79
      $region18: #{simple_classifier_forward.1} parent=11 // pred_check_branch
        %167 = sbr.rel (%p165) target = $region20
      $region19: #{simple_classifier_forward.1} parent=11 // pred_region
        _
      $region20: #{simple_classifier_forward.1} parent=11 // pred_fallthru
        _
      // Predicated region
      $region21: #{simple_classifier_forward.1} parent=11 // pred_check
        %p168 = pneg %p100
      $region22: #{simple_classifier_forward.1} parent=11 // pred_check_branch
        %170 = sbr.rel (%p168) target = $region24
      $region23: #{simple_classifier_forward.1} parent=11 // pred_region
        _
      $region24: #{simple_classifier_forward.1} parent=11 // pred_fallthru
        _
      // Predicated region
      $region25: #{simple_classifier_forward.1} parent=11 // pred_check
        %p171 = pneg %p121
      $region26: #{simple_classifier_forward.1} parent=11 // pred_check_branch
        %173 = sbr.rel (%p171) target = $region28
      $region27: #{simple_classifier_forward.1} parent=11 // pred_region
        _
      $region28: #{simple_classifier_forward.1} parent=11 // pred_fallthru
        _
    $region12: #{simple_classifier_forward.1} parent=5 // pred_fallthru
      _
    %p174 = scmp.lt.s32.totalorder %s11, 4
    // Predicated region
    $region29: #{simple_classifier_forward.1} parent=5 // pred_check
      %p175 = pneg %p174
    $region30: #{simple_classifier_forward.1} parent=5 // pred_check_branch
      %177 = sbr.rel (%p175) target = $region32
    $region31: #{simple_classifier_forward.1} parent=5 // pred_region
      // Predicated region
      $region33: #{simple_classifier_forward.1} parent=31 // pred_check
        %p178 = pneg %p31
      $region34: #{simple_classifier_forward.1} parent=31 // pred_check_branch
        %180 = sbr.rel (%p178) target = $region36
      $region35: #{simple_classifier_forward.1} parent=31 // pred_region
        %s181 = smul.u32 32, %s11
        %p182 = scmp.lt.s32.totalorder %s181, 127
        %s183 = scalar_select %p182, %s181, 127
        %s184 = smul.addr %s183, 4
        %s185 = scalar_lea.vmem %s0, %s184
        %s186 = smul.u32 32, %s11
      $region36: #{simple_classifier_forward.1} parent=31 // pred_fallthru
        _
    $region32: #{simple_classifier_forward.1} parent=5 // pred_fallthru
      _
    %p187 = scmp.le.s32.totalorder 1, %s11
    %p188 = scmp.lt.s32.totalorder %s11, 5
    %p189 = pnand %p187, %p188
    %p190 = pneg %p189
    // Predicated region
    $region37: #{simple_classifier_forward.1} parent=5 // pred_check
      _
    $region38: #{simple_classifier_forward.1} parent=5 // pred_check_branch
      %192 = sbr.rel (%p189) target = $region40
    $region39: #{simple_classifier_forward.1} parent=5 // pred_region
      %s193 = ssub.s32 %s11, 1
      %s194 = smul.u32 32, %s16
      %p195 = scmp.lt.s32.totalorder %s194, 127
      %s196 = scalar_select %p195, %s194, 127
      %s197 = smul.addr %s196, 4
      %s198 = scalar_lea.vmem %s0, %s197
      %p199 = pneg %p37
      %p200 = pneg %p34
      %p201 = pneg %p58
      %p202 = pneg %p55
      %p203 = pneg %p79
      %p204 = pneg %p76
      %p205 = pneg %p100
      %p206 = pneg %p97
      %p207 = pneg %p121
      %p208 = pneg %p118
      %p209 = pneg %p147
      %p210 = pneg %p144
      %s211 = smul.u32 32, %s16
      %p212 = scmp.lt.s32.totalorder %s211, 127
      %s213 = scalar_select %p212, %s211, 127
      %s214 = smul.addr %s213, 8
      %s215 = scalar_lea.vmem %s5, %s214
      %s216 = smul.u32 32, %s16
      %p217 = scmp.lt.s32.totalorder %s216, 127
      %s218 = scalar_select %p217, %s216, 127
      %s219 = smul.addr %s218, 4
      %s220 = scalar_lea.vmem %s0, %s219
      %s221 = smul.u32 32, %s16
      %s222 = smul.u32 32, %s16
      %p223 = scmp.lt.s32.totalorder %s222, 127
      %s224 = scalar_select %p223, %s222, 127
      %s225 = smul.addr %s224, 8
      %s226 = scalar_lea.vmem %s5, %s225
      %s227 = smul.u32 32, %s16
      %v229 = vld [vmem:[%s220] sm:$0xf]
      %v230 = vld [vmem:[%s220 + $0x4] sm:$0xf]
      %v231 = vld [vmem:[%s220 + $0x8] sm:$0xf]
      %v232 = vld [vmem:[%s220 + $0xc] sm:$0xf]
      %v233 = vld [vmem:[%s220 + $0x10] sm:$0xf]
      %v234 = vld [vmem:[%s220 + $0x14] sm:$0xf]
      %v235 = vld [vmem:[%s220 + $0x18] sm:$0xf]
      %v236 = vld [vmem:[%s220 + $0x1c] sm:$0xf]
      %v237 = vld [vmem:[%s220 + $0x20] sm:$0xf]
      %v238 = vld [vmem:[%s220 + $0x24] sm:$0xf]
      %v239 = vld [vmem:[%s220 + $0x28] sm:$0xf]
      %v240 = vld [vmem:[%s220 + $0x2c] sm:$0xf]
      %v241 = vld [vmem:[%s220 + $0x30] sm:$0xf]
      %v242 = vld [vmem:[%s220 + $0x34] sm:$0xf]
      %v243 = vld [vmem:[%s220 + $0x38] sm:$0xf]
      %v244 = vld [vmem:[%s220 + $0x3c] sm:$0xf]
      %v245 = vld [vmem:[%s220 + $0x40] sm:$0xf]
      %v246 = vld [vmem:[%s220 + $0x44] sm:$0xf]
      %v247 = vld [vmem:[%s220 + $0x48] sm:$0xf]
      %v248 = vld [vmem:[%s220 + $0x4c] sm:$0xf]
      %v249 = vld [vmem:[%s220 + $0x50] sm:$0xf]
      %v250 = vld [vmem:[%s220 + $0x54] sm:$0xf]
      %v251 = vld [vmem:[%s220 + $0x58] sm:$0xf]
      %v252 = vld [vmem:[%s220 + $0x5c] sm:$0xf]
      %v253 = vld [vmem:[%s220 + $0x60] sm:$0xf]
      %v254 = vld [vmem:[%s220 + $0x64] sm:$0xf]
      %v255 = vld [vmem:[%s220 + $0x68] sm:$0xf]
      %v256 = vld [vmem:[%s220 + $0x6c] sm:$0xf]
      %v257 = vld [vmem:[%s220 + $0x70] sm:$0xf]
      %v258 = vld [vmem:[%s220 + $0x74] sm:$0xf]
      %v259 = vld [vmem:[%s220 + $0x78] sm:$0xf]
      %v260 = vld [vmem:[%s220 + $0x7c] sm:$0xf]
      %v261 = vld [vmem:[%s1] sm:$0x3]
      %v262 = vld [vmem:[%s2] sm:$0x1]
      %v264 = vlaneseq
      %v265 = vshrl.u32 %v264, 7
      %v266 = vsub.s32 0, %v265
      %v267 = vrot.slane %v262, %v266
      %v301 = vunpack.c.l.b16 %v229
      %v302 = vunpack.c.l.b16 %v230
      %v303 = vunpack.c.l.b16 %v231
      %v304 = vunpack.c.l.b16 %v232
      %v305 = vunpack.c.l.b16 %v233
      %v306 = vunpack.c.l.b16 %v234
      %v307 = vunpack.c.l.b16 %v235
      %v308 = vunpack.c.l.b16 %v236
      %v309 = vunpack.c.l.b16 %v237
      %v310 = vunpack.c.l.b16 %v238
      %v311 = vunpack.c.l.b16 %v239
      %v312 = vunpack.c.l.b16 %v240
      %v313 = vunpack.c.l.b16 %v241
      %v314 = vunpack.c.l.b16 %v242
      %v315 = vunpack.c.l.b16 %v243
      %v316 = vunpack.c.l.b16 %v244
      %v317 = vunpack.c.l.b16 %v245
      %v318 = vunpack.c.l.b16 %v246
      %v319 = vunpack.c.l.b16 %v247
      %v320 = vunpack.c.l.b16 %v248
      %v321 = vunpack.c.l.b16 %v249
      %v322 = vunpack.c.l.b16 %v250
      %v323 = vunpack.c.l.b16 %v251
      %v324 = vunpack.c.l.b16 %v252
      %v325 = vunpack.c.l.b16 %v253
      %v326 = vunpack.c.l.b16 %v254
      %v327 = vunpack.c.l.b16 %v255
      %v328 = vunpack.c.l.b16 %v256
      %v329 = vunpack.c.l.b16 %v257
      %v330 = vunpack.c.l.b16 %v258
      %v331 = vunpack.c.l.b16 %v259
      %v332 = vunpack.c.l.b16 %v260
      %v333 = vpack.c.b16 %v302, %v301
      %v334 = vpack.c.b16 %v304, %v303
      %v335 = vpack.c.b16 %v306, %v305
      %v336 = vpack.c.b16 %v308, %v307
      %v337 = vpack.c.b16 %v310, %v309
      %v338 = vpack.c.b16 %v312, %v311
      %v339 = vpack.c.b16 %v314, %v313
      %v340 = vpack.c.b16 %v316, %v315
      %v341 = vpack.c.b16 %v318, %v317
      %v342 = vpack.c.b16 %v320, %v319
      %v343 = vpack.c.b16 %v322, %v321
      %v344 = vpack.c.b16 %v324, %v323
      %v345 = vpack.c.b16 %v326, %v325
      %v346 = vpack.c.b16 %v328, %v327
      %v347 = vpack.c.b16 %v330, %v329
      %v348 = vpack.c.b16 %v332, %v331
      %vm349 = vcmask 31744
      %v351 = vsel %vm349, %v333, 0
      %v354 = vsel %vm349, %v334, 0
      %v357 = vsel %vm349, %v335, 0
      %v360 = vsel %vm349, %v336, 0
      %v363 = vsel %vm349, %v337, 0
      %v366 = vsel %vm349, %v338, 0
      %v369 = vsel %vm349, %v339, 0
      %v372 = vsel %vm349, %v340, 0
      %v375 = vsel %vm349, %v341, 0
      %v378 = vsel %vm349, %v342, 0
      %v381 = vsel %vm349, %v343, 0
      %v384 = vsel %vm349, %v344, 0
      %v387 = vsel %vm349, %v345, 0
      %v390 = vsel %vm349, %v346, 0
      %v393 = vsel %vm349, %v347, 0
      %v396 = vsel %vm349, %v348, 0
      %vm398 = vcmask 1041408
      %v400 = vsel %vm398, %v261, 0
      %402 = vmatprep.subr.bf16.mxu0 0
      %403 = vmatpush1.bf16.msra.mxu0 %v400
      %404 = vmatprep.subr.bf16.mxu0 0
      %405 = vmatpush1.bf16.msra.mxu0 0
      %406 = vmatprep.subr.bf16.mxu0 0
      %407 = vmatpush1.bf16.msra.mxu0 0
      %408 = vmatprep.subr.bf16.mxu0 0
      %409 = vmatpush1.bf16.msra.mxu0 0
      %410 = vmatprep.subr.bf16.mxu0 0
      %411 = vmatpush1.bf16.msra.mxu0 0
      %412 = vmatprep.subr.bf16.mxu0 0
      %413 = vmatpush1.bf16.msra.mxu0 0
      %414 = vmatprep.subr.bf16.mxu0 0
      %415 = vmatpush1.bf16.msra.mxu0 0
      %416 = vmatprep.subr.bf16.mxu0 0
      %417 = vmatpush1.bf16.msra.mxu0 0
      %418 = vmatprep.subr.bf16.mxu0 0
      %419 = vmatpush1.bf16.msra.mxu0 0
      %420 = vmatprep.subr.bf16.mxu0 0
      %421 = vmatpush1.bf16.msra.mxu0 0
      %422 = vmatprep.subr.bf16.mxu0 0
      %423 = vmatpush1.bf16.msra.mxu0 0
      %424 = vmatprep.subr.bf16.mxu0 0
      %425 = vmatpush1.bf16.msra.mxu0 0
      %426 = vmatprep.subr.bf16.mxu0 0
      %427 = vmatpush1.bf16.msra.mxu0 0
      %428 = vmatprep.subr.bf16.mxu0 0
      %429 = vmatpush1.bf16.msra.mxu0 0
      %430 = vmatprep.subr.bf16.mxu0 0
      %431 = vmatpush1.bf16.msra.mxu0 0
      %432 = vmatprep.subr.bf16.mxu0 0
      %433 = vmatpush1.bf16.msra.mxu0 0
      %434 = vmatprep.mubr.bf16.mxu0 0
      %435 = vmatmul.mubr.bf16.gmra.mrb[0].mxu0 %v351
      %v436 = vpop.f32.mrb[0].mxu0
      %v437 = vadd.f32 %v267, %v436
      %v438 = vpop.f32.mrb[0].mxu0
      %v439 = vpop.f32.mrb[0].mxu0
      %v440 = vadd.f32 %v267, %v439
      %v441 = vpop.f32.mrb[0].mxu0
      %442 = vmatprep.mubr.bf16.mxu0 0
      %443 = vmatmul.mubr.bf16.gmra.mrb[0].mxu0 %v354
      %v444 = vpop.f32.mrb[0].mxu0
      %v445 = vadd.f32 %v267, %v444
      %v446 = vpop.f32.mrb[0].mxu0
      %v447 = vpop.f32.mrb[0].mxu0
      %v448 = vadd.f32 %v267, %v447
      %v449 = vpop.f32.mrb[0].mxu0
      %450 = vmatprep.mubr.bf16.mxu0 0
      %451 = vmatmul.mubr.bf16.gmra.mrb[0].mxu0 %v357
      %v452 = vpop.f32.mrb[0].mxu0
      %v453 = vadd.f32 %v267, %v452
      %v454 = vpop.f32.mrb[0].mxu0
      %v455 = vpop.f32.mrb[0].mxu0
      %v456 = vadd.f32 %v267, %v455
      %v457 = vpop.f32.mrb[0].mxu0
      %458 = vmatprep.mubr.bf16.mxu0 0
      %459 = vmatmul.mubr.bf16.gmra.mrb[0].mxu0 %v360
      %v460 = vpop.f32.mrb[0].mxu0
      %v461 = vadd.f32 %v267, %v460
      %v462 = vpop.f32.mrb[0].mxu0
      %v463 = vpop.f32.mrb[0].mxu0
      %v464 = vadd.f32 %v267, %v463
      %v465 = vpop.f32.mrb[0].mxu0
      %466 = vmatprep.mubr.bf16.mxu0 0
      %467 = vmatmul.mubr.bf16.gmra.mrb[0].mxu0 %v363
      %v468 = vpop.f32.mrb[0].mxu0
      %v469 = vadd.f32 %v267, %v468
      %v470 = vpop.f32.mrb[0].mxu0
      %v471 = vpop.f32.mrb[0].mxu0
      %v472 = vadd.f32 %v267, %v471
      %v473 = vpop.f32.mrb[0].mxu0
      %474 = vmatprep.mubr.bf16.mxu0 0
      %475 = vmatmul.mubr.bf16.gmra.mrb[0].mxu0 %v366
      %v476 = vpop.f32.mrb[0].mxu0
      %v477 = vadd.f32 %v267, %v476
      %v478 = vpop.f32.mrb[0].mxu0
      %v479 = vpop.f32.mrb[0].mxu0
      %v480 = vadd.f32 %v267, %v479
      %v481 = vpop.f32.mrb[0].mxu0
      %482 = vmatprep.mubr.bf16.mxu0 0
      %483 = vmatmul.mubr.bf16.gmra.mrb[0].mxu0 %v369
      %v484 = vpop.f32.mrb[0].mxu0
      %v485 = vadd.f32 %v267, %v484
      %v486 = vpop.f32.mrb[0].mxu0
      %v487 = vpop.f32.mrb[0].mxu0
      %v488 = vadd.f32 %v267, %v487
      %v489 = vpop.f32.mrb[0].mxu0
      %490 = vmatprep.mubr.bf16.mxu0 0
      %491 = vmatmul.mubr.bf16.gmra.mrb[0].mxu0 %v372
      %v492 = vpop.f32.mrb[0].mxu0
      %v493 = vadd.f32 %v267, %v492
      %v494 = vpop.f32.mrb[0].mxu0
      %v495 = vpop.f32.mrb[0].mxu0
      %v496 = vadd.f32 %v267, %v495
      %v497 = vpop.f32.mrb[0].mxu0
      %498 = vmatprep.mubr.bf16.mxu0 0
      %499 = vmatmul.mubr.bf16.gmra.mrb[0].mxu0 %v375
      %v500 = vpop.f32.mrb[0].mxu0
      %v501 = vadd.f32 %v267, %v500
      %v502 = vpop.f32.mrb[0].mxu0
      %v503 = vpop.f32.mrb[0].mxu0
      %v504 = vadd.f32 %v267, %v503
      %v505 = vpop.f32.mrb[0].mxu0
      %506 = vmatprep.mubr.bf16.mxu0 0
      %507 = vmatmul.mubr.bf16.gmra.mrb[0].mxu0 %v378
      %v508 = vpop.f32.mrb[0].mxu0
      %v509 = vadd.f32 %v267, %v508
      %v510 = vpop.f32.mrb[0].mxu0
      %v511 = vpop.f32.mrb[0].mxu0
      %v512 = vadd.f32 %v267, %v511
      %v513 = vpop.f32.mrb[0].mxu0
      %514 = vmatprep.mubr.bf16.mxu0 0
      %515 = vmatmul.mubr.bf16.gmra.mrb[0].mxu0 %v381
      %v516 = vpop.f32.mrb[0].mxu0
      %v517 = vadd.f32 %v267, %v516
      %v518 = vpop.f32.mrb[0].mxu0
      %v519 = vpop.f32.mrb[0].mxu0
      %v520 = vadd.f32 %v267, %v519
      %v521 = vpop.f32.mrb[0].mxu0
      %522 = vmatprep.mubr.bf16.mxu0 0
      %523 = vmatmul.mubr.bf16.gmra.mrb[0].mxu0 %v384
      %v524 = vpop.f32.mrb[0].mxu0
      %v525 = vadd.f32 %v267, %v524
      %v526 = vpop.f32.mrb[0].mxu0
      %v527 = vpop.f32.mrb[0].mxu0
      %v528 = vadd.f32 %v267, %v527
      %v529 = vpop.f32.mrb[0].mxu0
      %530 = vmatprep.mubr.bf16.mxu0 0
      %531 = vmatmul.mubr.bf16.gmra.mrb[0].mxu0 %v387
      %v532 = vpop.f32.mrb[0].mxu0
      %v533 = vadd.f32 %v267, %v532
      %v534 = vpop.f32.mrb[0].mxu0
      %v535 = vpop.f32.mrb[0].mxu0
      %v536 = vadd.f32 %v267, %v535
      %v537 = vpop.f32.mrb[0].mxu0
      %538 = vmatprep.mubr.bf16.mxu0 0
      %539 = vmatmul.mubr.bf16.gmra.mrb[0].mxu0 %v390
      %v540 = vpop.f32.mrb[0].mxu0
      %v541 = vadd.f32 %v267, %v540
      %v542 = vpop.f32.mrb[0].mxu0
      %v543 = vpop.f32.mrb[0].mxu0
      %v544 = vadd.f32 %v267, %v543
      %v545 = vpop.f32.mrb[0].mxu0
      %546 = vmatprep.mubr.bf16.mxu0 0
      %547 = vmatmul.mubr.bf16.gmra.mrb[0].mxu0 %v393
      %v548 = vpop.f32.mrb[0].mxu0
      %v549 = vadd.f32 %v267, %v548
      %v550 = vpop.f32.mrb[0].mxu0
      %v551 = vpop.f32.mrb[0].mxu0
      %v552 = vadd.f32 %v267, %v551
      %v553 = vpop.f32.mrb[0].mxu0
      %554 = vmatprep.mubr.bf16.mxu0 0
      %555 = vmatmul.mubr.bf16.gmra.mrb[0].mxu0 %v396
      %v556 = vpop.f32.mrb[0].mxu0
      %v557 = vadd.f32 %v267, %v556
      %v558 = vpop.f32.mrb[0].mxu0
      %v559 = vpop.f32.mrb[0].mxu0
      %v560 = vadd.f32 %v267, %v559
      %v561 = vpop.f32.mrb[0].mxu0
      %562 = vdwg.mxu0
      %v563 = vtanh.pop %v437
      %v564 = vtanh.pop %v440
      %v565 = vtanh.pop %v445
      %v566 = vtanh.pop %v448
      %v567 = vtanh.pop %v453
      %v568 = vtanh.pop %v456
      %v569 = vtanh.pop %v461
      %v570 = vtanh.pop %v464
      %v571 = vtanh.pop %v469
      %v572 = vtanh.pop %v472
      %v573 = vtanh.pop %v477
      %v574 = vtanh.pop %v480
      %v575 = vtanh.pop %v485
      %v576 = vtanh.pop %v488
      %v577 = vtanh.pop %v493
      %v578 = vtanh.pop %v496
      %v579 = vtanh.pop %v501
      %v580 = vtanh.pop %v504
      %v581 = vtanh.pop %v509
      %v582 = vtanh.pop %v512
      %v583 = vtanh.pop %v517
      %v584 = vtanh.pop %v520
      %v585 = vtanh.pop %v525
      %v586 = vtanh.pop %v528
      %v587 = vtanh.pop %v533
      %v588 = vtanh.pop %v536
      %v589 = vtanh.pop %v541
      %v590 = vtanh.pop %v544
      %v591 = vtanh.pop %v549
      %v592 = vtanh.pop %v552
      %v593 = vtanh.pop %v557
      %v594 = vtanh.pop %v560
      %v595 = vpack.c.bf16 %v564, %v563
      %v596 = vpack.c.bf16 %v566, %v565
      %v597 = vpack.c.bf16 %v568, %v567
      %v598 = vpack.c.bf16 %v570, %v569
      %v599 = vpack.c.bf16 %v572, %v571
      %v600 = vpack.c.bf16 %v574, %v573
      %v601 = vpack.c.bf16 %v576, %v575
      %v602 = vpack.c.bf16 %v578, %v577
      %v603 = vpack.c.bf16 %v580, %v579
      %v604 = vpack.c.bf16 %v582, %v581
      %v605 = vpack.c.bf16 %v584, %v583
      %v606 = vpack.c.bf16 %v586, %v585
      %v607 = vpack.c.bf16 %v588, %v587
      %v608 = vpack.c.bf16 %v590, %v589
      %v609 = vpack.c.bf16 %v592, %v591
      %v610 = vpack.c.bf16 %v594, %v593
      %v611 = vld [vmem:[%s3] sm:$0xf]
      %v612 = vld [vmem:[%s3 + $0x4] sm:$0xf]
      %v613 = vld [vmem:[%s3 + $0x8] sm:$0xf]
      %v614 = vld [vmem:[%s3 + $0xc] sm:$0xf]
      %v615 = vld [vmem:[%s3 + $0x10] sm:$0xf]
      %v616 = vld [vmem:[%s3 + $0x14] sm:$0xf]
      %v617 = vld [vmem:[%s3 + $0x18] sm:$0xf]
      %v618 = vld [vmem:[%s3 + $0x1c] sm:$0xf]
      %v619 = vld [vmem:[%s3 + $0x20] sm:$0xf]
      %v620 = vld [vmem:[%s3 + $0x24] sm:$0xf]
      %v621 = vld [vmem:[%s3 + $0x28] sm:$0xf]
      %v622 = vld [vmem:[%s3 + $0x2c] sm:$0xf]
      %v623 = vld [vmem:[%s3 + $0x30] sm:$0xf]
      %v624 = vld [vmem:[%s3 + $0x34] sm:$0xf]
      %v625 = vld [vmem:[%s3 + $0x38] sm:$0xf]
      %v626 = vld [vmem:[%s3 + $0x3c] sm:$0xf]
      %v627 = vld [vmem:[%s4] sm:$0x1]
      %v629 = vlaneseq
      %v630 = vshrl.u32 %v629, 7
      %v631 = vsub.s32 0, %v630
      %v632 = vrot.slane %v627, %v631
      %v650 = vunpack.c.l.b16 %v611
      %v651 = vunpack.c.l.b16 %v612
      %v652 = vunpack.c.l.b16 %v613
      %v653 = vunpack.c.l.b16 %v614
      %v654 = vunpack.c.l.b16 %v615
      %v655 = vunpack.c.l.b16 %v616
      %v656 = vunpack.c.l.b16 %v617
      %v657 = vunpack.c.l.b16 %v618
      %v658 = vunpack.c.l.b16 %v619
      %v659 = vunpack.c.l.b16 %v620
      %v660 = vunpack.c.l.b16 %v621
      %v661 = vunpack.c.l.b16 %v622
      %v662 = vunpack.c.l.b16 %v623
      %v663 = vunpack.c.l.b16 %v624
      %v664 = vunpack.c.l.b16 %v625
      %v665 = vunpack.c.l.b16 %v626
      %v666 = vpack.c.b16 %v651, %v650
      %v667 = vpack.c.b16 %v653, %v652
      %v668 = vpack.c.b16 %v655, %v654
      %v669 = vpack.c.b16 %v657, %v656
      %v670 = vpack.c.b16 %v659, %v658
      %v671 = vpack.c.b16 %v661, %v660
      %v672 = vpack.c.b16 %v663, %v662
      %v673 = vpack.c.b16 %v665, %v664
      %682 = vmatprep.subr.bf16.mxu0 0
      %683 = vmatpush1.bf16.msra.mxu0 %v666
      %684 = vmatprep.subr.bf16.mxu0 0
      %685 = vmatpush1.bf16.msra.mxu0 %v667
      %686 = vmatprep.subr.bf16.mxu0 0
      %687 = vmatpush1.bf16.msra.mxu0 %v668
      %688 = vmatprep.subr.bf16.mxu0 0
      %689 = vmatpush1.bf16.msra.mxu0 %v669
      %690 = vmatprep.subr.bf16.mxu0 0
      %691 = vmatpush1.bf16.msra.mxu0 %v670
      %692 = vmatprep.subr.bf16.mxu0 0
      %693 = vmatpush1.bf16.msra.mxu0 %v671
      %694 = vmatprep.subr.bf16.mxu0 0
      %695 = vmatpush1.bf16.msra.mxu0 %v672
      %696 = vmatprep.subr.bf16.mxu0 0
      %697 = vmatpush1.bf16.msra.mxu0 %v673
      %698 = vmatprep.subr.bf16.mxu0 0
      %699 = vmatpush1.bf16.msra.mxu0 0
      %700 = vmatprep.subr.bf16.mxu0 0
      %701 = vmatpush1.bf16.msra.mxu0 0
      %702 = vmatprep.subr.bf16.mxu0 0
      %703 = vmatpush1.bf16.msra.mxu0 0
      %704 = vmatprep.subr.bf16.mxu0 0
      %705 = vmatpush1.bf16.msra.mxu0 0
      %706 = vmatprep.subr.bf16.mxu0 0
      %707 = vmatpush1.bf16.msra.mxu0 0
      %708 = vmatprep.subr.bf16.mxu0 0
      %709 = vmatpush1.bf16.msra.mxu0 0
      %710 = vmatprep.subr.bf16.mxu0 0
      %711 = vmatpush1.bf16.msra.mxu0 0
      %712 = vmatprep.subr.bf16.mxu0 0
      %713 = vmatpush1.bf16.msra.mxu0 0
      %714 = vmatprep.mubr.bf16.mxu0 0
      %715 = vmatmul.mubr.bf16.gmra.mrb[0].mxu0 %v595
      %v716 = vpop.f32.mrb[0].mxu0
      %v717 = vadd.f32 %v632, %v716
      %v718 = vpop.f32.mrb[0].mxu0
      %v719 = vpop.f32.mrb[0].mxu0
      %v720 = vadd.f32 %v632, %v719
      %v721 = vpop.f32.mrb[0].mxu0
      %722 = vmatprep.mubr.bf16.mxu0 0
      %723 = vmatmul.mubr.bf16.gmra.mrb[0].mxu0 %v596
      %v724 = vpop.f32.mrb[0].mxu0
      %v725 = vadd.f32 %v632, %v724
      %v726 = vpop.f32.mrb[0].mxu0
      %v727 = vpop.f32.mrb[0].mxu0
      %v728 = vadd.f32 %v632, %v727
      %v729 = vpop.f32.mrb[0].mxu0
      %730 = vmatprep.mubr.bf16.mxu0 0
      %731 = vmatmul.mubr.bf16.gmra.mrb[0].mxu0 %v597
      %v732 = vpop.f32.mrb[0].mxu0
      %v733 = vadd.f32 %v632, %v732
      %v734 = vpop.f32.mrb[0].mxu0
      %v735 = vpop.f32.mrb[0].mxu0
      %v736 = vadd.f32 %v632, %v735
      %v737 = vpop.f32.mrb[0].mxu0
      %738 = vmatprep.mubr.bf16.mxu0 0
      %739 = vmatmul.mubr.bf16.gmra.mrb[0].mxu0 %v598
      %v740 = vpop.f32.mrb[0].mxu0
      %v741 = vadd.f32 %v632, %v740
      %v742 = vpop.f32.mrb[0].mxu0
      %v743 = vpop.f32.mrb[0].mxu0
      %v744 = vadd.f32 %v632, %v743
      %v745 = vpop.f32.mrb[0].mxu0
      %746 = vmatprep.mubr.bf16.mxu0 0
      %747 = vmatmul.mubr.bf16.gmra.mrb[0].mxu0 %v599
      %v748 = vpop.f32.mrb[0].mxu0
      %v749 = vadd.f32 %v632, %v748
      %v750 = vpop.f32.mrb[0].mxu0
      %v751 = vpop.f32.mrb[0].mxu0
      %v752 = vadd.f32 %v632, %v751
      %v753 = vpop.f32.mrb[0].mxu0
      %754 = vmatprep.mubr.bf16.mxu0 0
      %755 = vmatmul.mubr.bf16.gmra.mrb[0].mxu0 %v600
      %v756 = vpop.f32.mrb[0].mxu0
      %v757 = vadd.f32 %v632, %v756
      %v758 = vpop.f32.mrb[0].mxu0
      %v759 = vpop.f32.mrb[0].mxu0
      %v760 = vadd.f32 %v632, %v759
      %v761 = vpop.f32.mrb[0].mxu0
      %762 = vmatprep.mubr.bf16.mxu0 0
      %763 = vmatmul.mubr.bf16.gmra.mrb[0].mxu0 %v601
      %v764 = vpop.f32.mrb[0].mxu0
      %v765 = vadd.f32 %v632, %v764
      %v766 = vpop.f32.mrb[0].mxu0
      %v767 = vpop.f32.mrb[0].mxu0
      %v768 = vadd.f32 %v632, %v767
      %v769 = vpop.f32.mrb[0].mxu0
      %770 = vmatprep.mubr.bf16.mxu0 0
      %771 = vmatmul.mubr.bf16.gmra.mrb[0].mxu0 %v602
      %v772 = vpop.f32.mrb[0].mxu0
      %v773 = vadd.f32 %v632, %v772
      %v774 = vpop.f32.mrb[0].mxu0
      %v775 = vpop.f32.mrb[0].mxu0
      %v776 = vadd.f32 %v632, %v775
      %v777 = vpop.f32.mrb[0].mxu0
      %778 = vmatprep.mubr.bf16.mxu0 0
      %779 = vmatmul.mubr.bf16.gmra.mrb[0].mxu0 %v603
      %v780 = vpop.f32.mrb[0].mxu0
      %v781 = vadd.f32 %v632, %v780
      %v782 = vpop.f32.mrb[0].mxu0
      %v783 = vpop.f32.mrb[0].mxu0
      %v784 = vadd.f32 %v632, %v783
      %v785 = vpop.f32.mrb[0].mxu0
      %786 = vmatprep.mubr.bf16.mxu0 0
      %787 = vmatmul.mubr.bf16.gmra.mrb[0].mxu0 %v604
      %v788 = vpop.f32.mrb[0].mxu0
      %v789 = vadd.f32 %v632, %v788
      %v790 = vpop.f32.mrb[0].mxu0
      %v791 = vpop.f32.mrb[0].mxu0
      %v792 = vadd.f32 %v632, %v791
      %v793 = vpop.f32.mrb[0].mxu0
      %794 = vmatprep.mubr.bf16.mxu0 0
      %795 = vmatmul.mubr.bf16.gmra.mrb[0].mxu0 %v605
      %v796 = vpop.f32.mrb[0].mxu0
      %v797 = vadd.f32 %v632, %v796
      %v798 = vpop.f32.mrb[0].mxu0
      %v799 = vpop.f32.mrb[0].mxu0
      %v800 = vadd.f32 %v632, %v799
      %v801 = vpop.f32.mrb[0].mxu0
      %802 = vmatprep.mubr.bf16.mxu0 0
      %803 = vmatmul.mubr.bf16.gmra.mrb[0].mxu0 %v606
      %v804 = vpop.f32.mrb[0].mxu0
      %v805 = vadd.f32 %v632, %v804
      %v806 = vpop.f32.mrb[0].mxu0
      %v807 = vpop.f32.mrb[0].mxu0
      %v808 = vadd.f32 %v632, %v807
      %v809 = vpop.f32.mrb[0].mxu0
      %810 = vmatprep.mubr.bf16.mxu0 0
      %811 = vmatmul.mubr.bf16.gmra.mrb[0].mxu0 %v607
      %v812 = vpop.f32.mrb[0].mxu0
      %v813 = vadd.f32 %v632, %v812
      %v814 = vpop.f32.mrb[0].mxu0
      %v815 = vpop.f32.mrb[0].mxu0
      %v816 = vadd.f32 %v632, %v815
      %v817 = vpop.f32.mrb[0].mxu0
      %818 = vmatprep.mubr.bf16.mxu0 0
      %819 = vmatmul.mubr.bf16.gmra.mrb[0].mxu0 %v608
      %v820 = vpop.f32.mrb[0].mxu0
      %v821 = vadd.f32 %v632, %v820
      %v822 = vpop.f32.mrb[0].mxu0
      %v823 = vpop.f32.mrb[0].mxu0
      %v824 = vadd.f32 %v632, %v823
      %v825 = vpop.f32.mrb[0].mxu0
      %826 = vmatprep.mubr.bf16.mxu0 0
      %827 = vmatmul.mubr.bf16.gmra.mrb[0].mxu0 %v609
      %v828 = vpop.f32.mrb[0].mxu0
      %v829 = vadd.f32 %v632, %v828
      %v830 = vpop.f32.mrb[0].mxu0
      %v831 = vpop.f32.mrb[0].mxu0
      %v832 = vadd.f32 %v632, %v831
      %v833 = vpop.f32.mrb[0].mxu0
      %834 = vmatprep.mubr.bf16.mxu0 0
      %835 = vmatmul.mubr.bf16.gmra.mrb[0].mxu0 %v610
      %v836 = vpop.f32.mrb[0].mxu0
      %v837 = vadd.f32 %v632, %v836
      %v838 = vpop.f32.mrb[0].mxu0
      %v839 = vpop.f32.mrb[0].mxu0
      %v840 = vadd.f32 %v632, %v839
      %v841 = vpop.f32.mrb[0].mxu0
      %842 = vdwg.mxu0
      %843 = vst [vmem:[%s226] sm:$0xff] %v717
      %844 = vst [vmem:[%s226 + $0x8] sm:$0xff] %v720
      %845 = vst [vmem:[%s226 + $0x10] sm:$0xff] %v725
      %846 = vst [vmem:[%s226 + $0x18] sm:$0xff] %v728
      %847 = vst [vmem:[%s226 + $0x20] sm:$0xff] %v733
      %848 = vst [vmem:[%s226 + $0x28] sm:$0xff] %v736
      %849 = vst [vmem:[%s226 + $0x30] sm:$0xff] %v741
      %850 = vst [vmem:[%s226 + $0x38] sm:$0xff] %v744
      %851 = vst [vmem:[%s226 + $0x40] sm:$0xff] %v749
      %852 = vst [vmem:[%s226 + $0x48] sm:$0xff] %v752
      %853 = vst [vmem:[%s226 + $0x50] sm:$0xff] %v757
      %854 = vst [vmem:[%s226 + $0x58] sm:$0xff] %v760
      %855 = vst [vmem:[%s226 + $0x60] sm:$0xff] %v765
      %856 = vst [vmem:[%s226 + $0x68] sm:$0xff] %v768
      %857 = vst [vmem:[%s226 + $0x70] sm:$0xff] %v773
      %858 = vst [vmem:[%s226 + $0x78] sm:$0xff] %v776
      %859 = vst [vmem:[%s226 + $0x80] sm:$0xff] %v781
      %860 = vst [vmem:[%s226 + $0x88] sm:$0xff] %v784
      %861 = vst [vmem:[%s226 + $0x90] sm:$0xff] %v789
      %862 = vst [vmem:[%s226 + $0x98] sm:$0xff] %v792
      %863 = vst [vmem:[%s226 + $0xa0] sm:$0xff] %v797
      %864 = vst [vmem:[%s226 + $0xa8] sm:$0xff] %v800
      %865 = vst [vmem:[%s226 + $0xb0] sm:$0xff] %v805
      %866 = vst [vmem:[%s226 + $0xb8] sm:$0xff] %v808
      %867 = vst [vmem:[%s226 + $0xc0] sm:$0xff] %v813
      %868 = vst [vmem:[%s226 + $0xc8] sm:$0xff] %v816
      %869 = vst [vmem:[%s226 + $0xd0] sm:$0xff] %v821
      %870 = vst [vmem:[%s226 + $0xd8] sm:$0xff] %v824
      %871 = vst [vmem:[%s226 + $0xe0] sm:$0xff] %v829
      %872 = vst [vmem:[%s226 + $0xe8] sm:$0xff] %v832
      %873 = vst [vmem:[%s226 + $0xf0] sm:$0xff] %v837
      %874 = vst [vmem:[%s226 + $0xf8] sm:$0xff] %v840
      %s875 = smul.u32 32, %s16
      %p876 = scmp.lt.s32.totalorder %s875, 127
      %s877 = scalar_select %p876, %s875, 127
      %s878 = smul.addr %s877, 8
      %s879 = scalar_lea.vmem %s5, %s878
      // Predicated region
      $region41: #{simple_classifier_forward.1} parent=39 // pred_check
        %p880 = pneg %p144
      $region42: #{simple_classifier_forward.1} parent=39 // pred_check_branch
        %882 = sbr.rel (%p880) target = $region44
      $region43: #{simple_classifier_forward.1} parent=39 // pred_region
        %s883 = smul.u32 32, %s16
      $region44: #{simple_classifier_forward.1} parent=39 // pred_fallthru
        _
    $region40: #{simple_classifier_forward.1} parent=5 // pred_fallthru
      _
    %p884 = scmp.le.s32.totalorder 2, %s11
    // Predicated region
    $region45: #{simple_classifier_forward.1} parent=5 // pred_check
      %p885 = pneg %p884
    $region46: #{simple_classifier_forward.1} parent=5 // pred_check_branch
      %887 = sbr.rel (%p885) target = $region48
    $region47: #{simple_classifier_forward.1} parent=5 // pred_region
      %s888 = ssub.s32 %s11, 2
      // Predicated region
      $region49: #{simple_classifier_forward.1} parent=47 // pred_check
        %p889 = pneg %p150
      $region50: #{simple_classifier_forward.1} parent=47 // pred_check_branch
        %891 = sbr.rel (%p889) target = $region52
      $region51: #{simple_classifier_forward.1} parent=47 // pred_region
        %s892 = smul.u32 32, %s17
        %p893 = scmp.lt.s32.totalorder %s892, 127
        %s894 = scalar_select %p893, %s892, 127
        %s895 = smul.addr %s894, 8
        %s896 = scalar_lea.vmem %s5, %s895
      $region52: #{simple_classifier_forward.1} parent=47 // pred_fallthru
        _
    $region48: #{simple_classifier_forward.1} parent=5 // pred_fallthru
      _
  $region6: #{simple_classifier_forward.1} parent=0 // loop_footer
    %s15 = sadd.s32 1, %s11
  $region7: #{simple_classifier_forward.1} parent=0 // loop_footer_branch
    %10 = sbr.rel target = $region3
  $region8: #{simple_classifier_forward.1} parent=0 // loop_exit
    _

</llo_original>
